<compile_context>
chip_gen: v7x
topology: tpu7x:2x2x1
jax: 0.10.0
libtpu: 0.0.40
codegen_flags: <defaults>
</compile_context>

<pallas_src>
import jax
import jax.numpy as jnp
from jax.experimental import pallas as pl
from jax.experimental.pallas import tpu as pltpu

_LANE = 128
_SUBLANE = 8
_LORA_SLAB = 128                     # low-rank term occupies one 128-wide K slab
_VMEM_SOFT_CAP = 48 * 1024 * 1024    # headroom under v7x's 64 MiB VMEM / TC


def _round_up(x, m):
    return ((x + m - 1) // m) * m


def _pick_tile(dim, max_tile, align, min_tiles=1):
    """Tile size: multiple of `align`, <= max_tile (aligned), covers `dim`.
    With min_tiles=2 the tile is shrunk so the parallel grid axis has >= 2
    tiles (keeps both v7x TensorCores busy)."""
    dim_al = _round_up(max(dim, 1), align)
    tile = min(_round_up(max_tile, align), dim_al)
    while min_tiles > 1 and -(-dim_al // tile) < min_tiles and tile > align:
        tile = max(align, _round_up(tile // 2, align))
    return tile


def _fused_kernel_f32_out(x_ref, w_ref, bias_ref, o_ref):
    """f32 output: accumulate straight into the resident output block
    (saves tm*tn*4 bytes of scratch and the epilogue copy)."""
    k = pl.program_id(2)

    @pl.when(k == 0)
    def _():
        o_ref[...] = jnp.zeros_like(o_ref)

    o_ref[...] += jnp.dot(x_ref[...], w_ref[...],
                          preferred_element_type=jnp.float32)

    @pl.when(k == pl.num_programs(2) - 1)
    def _():
        o_ref[...] += bias_ref[...]


def _fused_kernel_acc(x_ref, w_ref, bias_ref, o_ref, acc_ref):
    """Narrow (e.g. bf16) output: f32 VMEM accumulator, cast in the epilogue."""
    k = pl.program_id(2)

    @pl.when(k == 0)
    def _():
        acc_ref[...] = jnp.zeros_like(acc_ref)

    acc_ref[...] += jnp.dot(x_ref[...], w_ref[...],
                            preferred_element_type=jnp.float32)

    @pl.when(k == pl.num_programs(2) - 1)
    def _():
        o_ref[...] = (acc_ref[...] + bias_ref[...]).astype(o_ref.dtype)


def prepare_lora_linear_params(w, bias, a, b, *, alpha, rank,
                               compute_dtype=jnp.bfloat16, tn=512, tk=1024):
    """One-time parameter preparation (do NOT call per forward).

    w:    (out_dim, in_dim)  nn.Linear weight
    bias: (out_dim,)
    a:    (in_dim, rank)     LoRA A
    b:    (rank, out_dim)    LoRA B

    Builds the padded, pre-cast augmented weight
        w_aug = [[ W^T        ],        rows [0, in_dim)
                 [ 0          ],        rows [in_dim, Kx)        (zero pad)
                 [ scaling*B  ],        rows [Kx, Kx+rank)
                 [ 0          ]]        rows [Kx+rank, K_total)  (zero pad)
    so the whole layer is a single matmul against the augmented input
    [x | x@A] plus bias.
    """
    out_dim, in_dim = w.shape
    scaling = float(alpha) / float(rank)

    kx = _round_up(in_dim, _LANE)
    k_raw = kx + _LORA_SLAB
    tk_eff = _pick_tile(k_raw, tk, _LANE)
    k_total = _round_up(k_raw, tk_eff)

    # Try to give the N axis >= 2 tiles when out_dim allows it (v7x 2 TCs).
    tn_eff = _pick_tile(out_dim, tn, _LANE,
                        min_tiles=2 if out_dim >= 2 * _LANE else 1)
    n_total = _round_up(out_dim, tn_eff)

    wt = jnp.asarray(w).T.astype(jnp.float32)                       # (in_dim, out_dim)
    b_scaled = scaling * jnp.asarray(b).astype(jnp.float32)         # fold scaling into B
    w_aug = jnp.zeros((k_total, n_total), jnp.float32)
    w_aug = w_aug.at[:in_dim, :out_dim].set(wt)
    w_aug = w_aug.at[kx:kx + rank, :out_dim].set(b_scaled)
    w_aug = w_aug.astype(compute_dtype)                             # cast ONCE here

    bias_p = jnp.zeros((1, n_total), jnp.float32)
    bias_p = bias_p.at[0, :out_dim].set(jnp.asarray(bias).astype(jnp.float32))

    return {
        "w_aug": w_aug,                       # (K_total, N_total), compute_dtype
        "bias": bias_p,                       # (1, N_total), f32
        "a": jnp.asarray(a).astype(jnp.float32),  # (in_dim, rank), f32
        "in_dim": in_dim, "out_dim": out_dim, "rank": rank,
        "kx": kx, "k_total": k_total, "n_total": n_total,
        "tn": tn_eff, "tk": tk_eff,
        "compute_dtype": compute_dtype,
    }


def linear_lora_forward(x, params, *, tm=512, w_buffers=2):
    """x: (batch, in_dim) -> (batch, out_dim).  params from prepare_*()."""
    batch, in_dim = x.shape
    assert in_dim == params["in_dim"], "in_dim mismatch"
    kx, k_total, n_total = params["kx"], params["k_total"], params["n_total"]
    tn_eff, tk_eff = params["tn"], params["tk"]
    rank = params["rank"]
    cdt = params["compute_dtype"]
    out_dtype = x.dtype
    out_itemsize = jnp.dtype(out_dtype).itemsize
    in_itemsize = jnp.dtype(cdt).itemsize

    grid_n = n_total // tn_eff
    # If N has only one parallel tile, split M instead so the grid still has
    # >= 2 parallel tiles for the second v7x TensorCore (when batch allows).
    tm_eff = _pick_tile(batch, tm, _SUBLANE,
                        min_tiles=2 if (grid_n == 1 and batch >= 2 * _SUBLANE) else 1)
    m_total = _round_up(batch, tm_eff)
    grid_m = m_total // tm_eff
    grid_k = k_total // tk_eff
    grid = (grid_m, grid_n, grid_k)

    # Tiny LoRA intermediate kept in f32 (no mid-path downcast); cast to the
    # MXU compute dtype only when it joins the augmented input slab.
    xa = jnp.dot(x.astype(jnp.float32), params["a"],
                 preferred_element_type=jnp.float32)                # (batch, rank)
    x_main = jnp.pad(x.astype(jnp.float32),
                     ((0, m_total - batch), (0, kx - in_dim)))
    xa_p = jnp.pad(xa, ((0, m_total - batch), (0, k_total - kx - rank)))
    x_aug = jnp.concatenate([x_main, xa_p], axis=1).astype(cdt)     # (M, K_total)

    f32_out = out_dtype == jnp.float32
    kernel = _fused_kernel_f32_out if f32_out else _fused_kernel_acc
    scratch = [] if f32_out else [pltpu.VMEM((tm_eff, tn_eff), jnp.float32)]

    # Optional deeper buffering on the weight stream (use when xprof shows
    # exposed W DMA waits in the K loop for small-batch shapes).
    w_spec_kwargs = {}
    if w_buffers and w_buffers > 2:
        w_spec_kwargs["pipeline_mode"] = pl.Buffered(w_buffers)
    w_spec = pl.BlockSpec((tk_eff, tn_eff), lambda i, j, k: (k, j),
                          **w_spec_kwargs)

    # VMEM budget: double-buffered tiles + accumulator, with headroom.
    buf_w = max(2, int(w_buffers) if w_buffers else 2)
    footprint = (2 * tm_eff * tk_eff * in_itemsize
                 + buf_w * tk_eff * tn_eff * in_itemsize
                 + 2 * tn_eff * 4
                 + 2 * tm_eff * tn_eff * out_itemsize
                 + (0 if f32_out else tm_eff * tn_eff * 4))
    vmem_limit = int(min(_VMEM_SOFT_CAP, max(2 * footprint, 32 * 1024 * 1024)))

    # Cost estimate on padded shapes, counting grid re-reads of each stream.
    flops = 2 * m_total * k_total * n_total
    bytes_accessed = int(
        m_total * k_total * in_itemsize * grid_n      # x_aug re-read per N tile
        + k_total * n_total * in_itemsize * grid_m    # w_aug re-read per M tile
        + n_total * 4 * grid_m                        # bias
        + m_total * n_total * out_itemsize)           # output write

    out_padded = pl.pallas_call(
        kernel,
        out_shape=jax.ShapeDtypeStruct((m_total, n_total), out_dtype),
        grid_spec=pltpu.PrefetchScalarGridSpec(
            num_scalar_prefetch=0,
            grid=grid,
            in_specs=[
                pl.BlockSpec((tm_eff, tk_eff), lambda i, j, k: (i, k)),  # x_aug
                w_spec,                                                  # w_aug
                pl.BlockSpec((1, tn_eff), lambda i, j, k: (0, j)),       # bias
            ],
            out_specs=pl.BlockSpec((tm_eff, tn_eff), lambda i, j, k: (i, j)),
            scratch_shapes=scratch,
        ),
        compiler_params=pltpu.CompilerParams(
            dimension_semantics=("parallel", "parallel", "arbitrary"),
            vmem_limit_bytes=vmem_limit,
        ),
        cost_estimate=pl.CostEstimate(
            flops=flops, transcendentals=0, bytes_accessed=bytes_accessed),
    )(x_aug, params["w_aug"], params["bias"])

    return out_padded[:batch, :params["out_dim"]]


if __name__ == "__main__":
    # Small shapes consistent with the module: x is (batch, in_features).
    batch, in_dim, out_dim, rank, alpha = 8, 32, 64, 4, 8.0
    scaling = alpha / rank

    key = jax.random.PRNGKey(0)
    kx_, kw_, kb_, ka_, kB_ = jax.random.split(key, 5)

    x = jax.random.normal(kx_, (batch, in_dim), dtype=jnp.float32)
    # nn.Linear weight is (out_dim, in_dim).
    w = jax.random.normal(kw_, (out_dim, in_dim), dtype=jnp.float32) * (1.0 / in_dim ** 0.5)
    bias = jax.random.normal(kb_, (out_dim,), dtype=jnp.float32) * 0.1
    A = jax.random.normal(ka_, (in_dim, rank), dtype=jnp.float32)
    # Module init uses B = zeros; small random values here so the fused LoRA
    # path is actually exercised (forward semantics are unchanged).
    B = jax.random.normal(kB_, (rank, out_dim), dtype=jnp.float32) * 0.05

    # Pure-JAX f32 reference.
    ref = x @ w.T + bias + scaling * ((x @ A) @ B)

    # 1) Default bf16 MXU path (f32 accumulation) — documented bf16 drift.
    params_bf16 = prepare_lora_linear_params(w, bias, A, B, alpha=alpha, rank=rank)
    out = jax.block_until_ready(linear_lora_forward(x, params_bf16))
    assert out.shape == (batch, out_dim)
    assert jnp.allclose(out, ref, atol=8e-2, rtol=5e-2), "bf16 path mismatch"

    # 2) f32 compute path — bit-accurate check of the fused kernel math.
    params_f32 = prepare_lora_linear_params(w, bias, A, B, alpha=alpha, rank=rank,
                                            compute_dtype=jnp.float32)
    out_f32 = jax.block_until_ready(linear_lora_forward(x, params_f32))
    assert jnp.allclose(out_f32, ref, atol=1e-4, rtol=1e-4), "f32 path mismatch"

    # 3) bf16 activations / bf16 output — exercises the acc-scratch kernel.
    x_bf16 = x.astype(jnp.bfloat16)
    out_bf = jax.block_until_ready(linear_lora_forward(x_bf16, params_bf16))
    ref_bf = (x_bf16.astype(jnp.float32) @ w.T + bias
              + scaling * ((x_bf16.astype(jnp.float32) @ A) @ B))
    assert out_bf.dtype == jnp.bfloat16
    assert jnp.allclose(out_bf.astype(jnp.float32), ref_bf, atol=1.5e-1, rtol=1e-1), \
        "bf16-output path mismatch"

    print("KERNEL_OK")
</pallas_src>

<mosaic_0001>
module attributes {stable_mosaic.version = 11 : i64} {
  func.func @_fused_kernel_f32_out(%arg0: i32, %arg1: i32, %arg2: i32, %arg3: memref<8x256xbf16, #tpu.memory_space<vmem>>, %arg4: memref<256x128xbf16, #tpu.memory_space<vmem>>, %arg5: memref<1x128xf32, #tpu.memory_space<vmem>>, %arg6: memref<8x128xf32, #tpu.memory_space<vmem>>) attributes {dimension_semantics = [#tpu.dimension_semantics<parallel>, #tpu.dimension_semantics<parallel>, #tpu.dimension_semantics<arbitrary>], iteration_bounds = array<i64: 1, 1, 1>, scalar_prefetch = 0 : i64, scratch_operands = 0 : i64, tpu.core_type = #tpu.core_type<tc>, window_params = [{transform_indices = @transform_0, window_bounds = array<i64: 8, 256>}, {transform_indices = @transform_1, window_bounds = array<i64: 256, 128>}, {transform_indices = @transform_2, window_bounds = array<i64: 1, 128>}, {transform_indices = @transform_3, window_bounds = array<i64: 8, 128>}]} {
    %c0_i32 = arith.constant 0 : i32
    %0 = arith.cmpi eq, %arg2, %c0_i32 : i32
    %1 = arith.extui %0 : i1 to i32
    %c0_i32_0 = arith.constant 0 : i32
    %2 = arith.cmpi ne, %1, %c0_i32_0 : i32
    scf.if %2 {
      %cst_10 = arith.constant 0.000000e+00 : f32
      %12 = vector.broadcast %cst_10 : f32 to vector<8x128xf32>
      %c0_11 = arith.constant 0 : index
      %c0_12 = arith.constant 0 : index
      %13 = vector.load %arg6[%c0_11, %c0_12] : memref<8x128xf32, #tpu.memory_space<vmem>>, vector<8x128xf32>
      tpu.vector_store %arg6[%c0_11, %c0_12], %12 {strides = array<i32>} : memref<8x128xf32, #tpu.memory_space<vmem>>, vector<8x128xf32>,
    } else {
    }
    %c0 = arith.constant 0 : index
    %c0_1 = arith.constant 0 : index
    %3 = vector.load %arg6[%c0, %c0_1] : memref<8x128xf32, #tpu.memory_space<vmem>>, vector<8x128xf32>
    %c0_2 = arith.constant 0 : index
    %c0_3 = arith.constant 0 : index
    %4 = vector.load %arg3[%c0_2, %c0_3] : memref<8x256xbf16, #tpu.memory_space<vmem>>, vector<8x256xbf16>
    %c0_4 = arith.constant 0 : index
    %c0_5 = arith.constant 0 : index
    %5 = vector.load %arg4[%c0_4, %c0_5] : memref<256x128xbf16, #tpu.memory_space<vmem>>, vector<256x128xbf16>
    %cst = arith.constant dense<0.000000e+00> : vector<8x128xf32>
    %6 = tpu.matmul %4, %5, %cst {dimension_numbers = #tpu.dot_dimension_numbers<[1], [0], [0], [1], [0, 0, 1, 1], [], []>} : vector<8x256xbf16>, vector<256x128xbf16>, vector<8x128xf32> -> vector<8x128xf32>
    %7 = arith.addf %3, %6 : vector<8x128xf32>
    %c0_6 = arith.constant 0 : index
    %c0_7 = arith.constant 0 : index
    %8 = vector.load %arg6[%c0_6, %c0_7] : memref<8x128xf32, #tpu.memory_space<vmem>>, vector<8x128xf32>
    tpu.vector_store %arg6[%c0_6, %c0_7], %7 {strides = array<i32>} : memref<8x128xf32, #tpu.memory_space<vmem>>, vector<8x128xf32>,
    %c0_i32_8 = arith.constant 0 : i32
    %9 = arith.cmpi eq, %arg2, %c0_i32_8 : i32
    %10 = arith.extui %9 : i1 to i32
    %c0_i32_9 = arith.constant 0 : i32
    %11 = arith.cmpi ne, %10, %c0_i32_9 : i32
    scf.if %11 {
      %c0_10 = arith.constant 0 : index
      %c0_11 = arith.constant 0 : index
      %12 = vector.load %arg6[%c0_10, %c0_11] : memref<8x128xf32, #tpu.memory_space<vmem>>, vector<8x128xf32>
      %c0_12 = arith.constant 0 : index
      %c0_13 = arith.constant 0 : index
      %13 = vector.load %arg5[%c0_12, %c0_13] : memref<1x128xf32, #tpu.memory_space<vmem>>, vector<1x128xf32>
      %14 = vector.broadcast %13 : vector<1x128xf32> to vector<8x128xf32>
      %15 = arith.addf %12, %14 : vector<8x128xf32>
      %c0_14 = arith.constant 0 : index
      %c0_15 = arith.constant 0 : index
      %16 = vector.load %arg6[%c0_14, %c0_15] : memref<8x128xf32, #tpu.memory_space<vmem>>, vector<8x128xf32>
      tpu.vector_store %arg6[%c0_14, %c0_15], %15 {strides = array<i32>} : memref<8x128xf32, #tpu.memory_space<vmem>>, vector<8x128xf32>,
    } else {
    }
    return
  }
  func.func @transform_0(%arg0: i32, %arg1: i32, %arg2: i32) -> (i32, i32) {
    %c0_i32 = arith.constant 0 : i32
    return %arg0, %arg2 : i32, i32
  }
  func.func @transform_1(%arg0: i32, %arg1: i32, %arg2: i32) -> (i32, i32) {
    %c0_i32 = arith.constant 0 : i32
    return %arg2, %arg1 : i32, i32
  }
  func.func @transform_2(%arg0: i32, %arg1: i32, %arg2: i32) -> (i32, i32) {
    %c0_i32 = arith.constant 0 : i32
    %c0_i32_0 = arith.constant 0 : i32
    return %c0_i32, %arg1 : i32, i32
  }
  func.func @transform_3(%arg0: i32, %arg1: i32, %arg2: i32) -> (i32, i32) {
    %c0_i32 = arith.constant 0 : i32
    return %arg0, %arg1 : i32, i32
  }
}

</mosaic_0001>

<llo_original>
// kernel: tpu_custom_call.1
$region0: #{tpu_custom_call.1}
  #allocation0 [shape = 'u32[]', space=smem, size = 0x4, offset = 0x4, fixed_abs, tag = 'smem constant byte address 0x4 - core index']
  #allocation1 [shape = 'u32[144,128]{1,0:T(1,128)}', space=vmem, size = 0x12000, scoped, tag = 'internal scratch']
  %s0 = inlined_call_operand.hbm [shape: bf16[8,256], index: 0, kind: input, shape index: {}]
  %s1 = inlined_call_operand.hbm [shape: bf16[256,128], index: 1, kind: input, shape index: {}]
  %s2 = inlined_call_operand.vmem [shape: f32[1,128], index: 2, kind: input, shape index: {}]
  %s3 = inlined_call_operand.hbm [shape: f32[8,128], index: 3, kind: output, shape index: {}]
  %s4 = sld [smem:[#allocation0]]
  $region38: #{tpu_custom_call.1} parent=0
    _
  %s6 = ssub.s32 1, %s4
  %s7 = scalar_select 0, %s6, %s4
  $region1: #{tpu_custom_call.1} parent=0
    #allocation2 [shape = 'u8[4096]{0}', space=vmem, size = 0x1000, scoped, tag = 'input window, operand 0, single buffered']
    #allocation3 [shape = 's32[1]{0}', space=sflag, size = 0x4, scoped, tag = 'scoped memory for tpu_custom_call.1']
    #allocation4 [shape = 's32[1]{0}', space=sflag, size = 0x4, scoped, tag = 'scoped memory for tpu_custom_call.1']
    #allocation5 [shape = 'u8[65536]{0}', space=vmem, size = 0x10000, scoped, tag = 'input window, operand 1, single buffered']
    #allocation6 [shape = 's32[1]{0}', space=sflag, size = 0x4, scoped, tag = 'scoped memory for tpu_custom_call.1']
    #allocation7 [shape = 'u8[4096]{0}', space=vmem, size = 0x1000, scoped, tag = 'output window, operand 0, single buffered']
    %8 = vsyncpa [#allocation3], 0
    %9 = vsyncpa [#allocation6], 0
    %10 = vsyncpa [#allocation4], 0
    // Predicated region
    $region2: #{tpu_custom_call.1} parent=1 // pred_check
      _
    $region3: #{tpu_custom_call.1} parent=1 // pred_check_branch
      %12 = sbr.rel (0) target = $region5
    $region4: #{tpu_custom_call.1} parent=1 // pred_region
      %s14 = ssub.s32 128, 128
      %15 = vsyncadd [#allocation3], %s14
      %s17 = sshll.u32 [#allocation2], 4
      %s18 = int_to_ptr.vmem [resolvable:$true] %s17
      %20 = dma.hbm_to_vmem [thread:$0]  %s0, 128, %s18, [#allocation3]
    $region5: #{tpu_custom_call.1} parent=1 // pred_fallthru
      _
    // Predicated region
    $region6: #{tpu_custom_call.1} parent=1 // pred_check
      _
    $region7: #{tpu_custom_call.1} parent=1 // pred_check_branch
      %22 = sbr.rel (0) target = $region9
    $region8: #{tpu_custom_call.1} parent=1 // pred_region
      %s24 = ssub.s32 2048, 2048
      %25 = vsyncadd [#allocation6], %s24
      %s26 = sshll.u32 [#allocation5], 4
      %s27 = int_to_ptr.vmem [resolvable:$true] %s26
      %32 = dma.hbm_to_vmem [thread:$0]  %s1, 2048, %s27, [#allocation6], 64, 64, 4
    $region9: #{tpu_custom_call.1} parent=1 // pred_fallthru
      _
    // Predicated region
    $region10: #{tpu_custom_call.1} parent=1 // pred_check
      _
    $region11: #{tpu_custom_call.1} parent=1 // pred_check_branch
      %34 = sbr.rel (0) target = $region13
    $region12: #{tpu_custom_call.1} parent=1 // pred_region
      _
    $region13: #{tpu_custom_call.1} parent=1 // pred_fallthru
      _
    // Predicated region
    $region14: #{tpu_custom_call.1} parent=1 // pred_check
      _
    $region15: #{tpu_custom_call.1} parent=1 // pred_check_branch
      %36 = sbr.rel (0) target = $region17
    $region16: #{tpu_custom_call.1} parent=1 // pred_region
      %37 = dma.done [#allocation3], 128
    $region17: #{tpu_custom_call.1} parent=1 // pred_fallthru
      _
    // Predicated region
    $region18: #{tpu_custom_call.1} parent=1 // pred_check
      _
    $region19: #{tpu_custom_call.1} parent=1 // pred_check_branch
      %39 = sbr.rel (0) target = $region21
    $region20: #{tpu_custom_call.1} parent=1 // pred_region
      %40 = dma.done [#allocation6], 2048
    $region21: #{tpu_custom_call.1} parent=1 // pred_fallthru
      _
    %p42 = scmp.eq.s32.totalorder 0, 0
    // Predicated region
    $region22: #{tpu_custom_call.1} parent=1 // pred_check
      %p43 = pneg %p42
    $region23: #{tpu_custom_call.1} parent=1 // pred_check_branch
      %45 = sbr.rel (%p43) target = $region25
    $region24: #{tpu_custom_call.1} parent=1 // pred_region
      %46 = vst [vmem:[#allocation7] sm:$0xff] 0.0
    $region25: #{tpu_custom_call.1} parent=1 // pred_fallthru
      _
    %v47 = vld [vmem:[#allocation7] sm:$0xff]
    %v48 = vld [vmem:[#allocation2] sm:$0xff]
    %v49 = vld [vmem:[#allocation5] sm:$0xf]
    %v50 = vld [vmem:[#allocation5 + $0x4] sm:$0xf]
    %v51 = vld [vmem:[#allocation5 + $0x8] sm:$0xf]
    %v52 = vld [vmem:[#allocation5 + $0xc] sm:$0xf]
    %v53 = vld [vmem:[#allocation5 + $0x10] sm:$0xf]
    %v54 = vld [vmem:[#allocation5 + $0x14] sm:$0xf]
    %v55 = vld [vmem:[#allocation5 + $0x18] sm:$0xf]
    %v56 = vld [vmem:[#allocation5 + $0x1c] sm:$0xf]
    %v57 = vld [vmem:[#allocation5 + $0x20] sm:$0xf]
    %v58 = vld [vmem:[#allocation5 + $0x24] sm:$0xf]
    %v59 = vld [vmem:[#allocation5 + $0x28] sm:$0xf]
    %v60 = vld [vmem:[#allocation5 + $0x2c] sm:$0xf]
    %v61 = vld [vmem:[#allocation5 + $0x30] sm:$0xf]
    %v62 = vld [vmem:[#allocation5 + $0x34] sm:$0xf]
    %v63 = vld [vmem:[#allocation5 + $0x38] sm:$0xf]
    %v64 = vld [vmem:[#allocation5 + $0x3c] sm:$0xf]
    %v65 = vld [vmem:[#allocation5 + $0x40] sm:$0xf]
    %v66 = vld [vmem:[#allocation5 + $0x44] sm:$0xf]
    %v67 = vld [vmem:[#allocation5 + $0x48] sm:$0xf]
    %v68 = vld [vmem:[#allocation5 + $0x4c] sm:$0xf]
    %v69 = vld [vmem:[#allocation5 + $0x50] sm:$0xf]
    %v70 = vld [vmem:[#allocation5 + $0x54] sm:$0xf]
    %v71 = vld [vmem:[#allocation5 + $0x58] sm:$0xf]
    %v72 = vld [vmem:[#allocation5 + $0x5c] sm:$0xf]
    %v73 = vld [vmem:[#allocation5 + $0x60] sm:$0xf]
    %v74 = vld [vmem:[#allocation5 + $0x64] sm:$0xf]
    %v75 = vld [vmem:[#allocation5 + $0x68] sm:$0xf]
    %v76 = vld [vmem:[#allocation5 + $0x6c] sm:$0xf]
    %v77 = vld [vmem:[#allocation5 + $0x70] sm:$0xf]
    %v78 = vld [vmem:[#allocation5 + $0x74] sm:$0xf]
    %v79 = vld [vmem:[#allocation5 + $0x78] sm:$0xf]
    %v80 = vld [vmem:[#allocation5 + $0x7c] sm:$0xf]
    %v82 = vunpack.c.l.b16 %v48
    %v83 = vunpack.c.h.b16 %v48
    %v84 = vpack.c.b16 %v82, %v82
    %v85 = vpack.c.b16 %v83, %v83
    %v120 = vunpack.c.l.b16 %v49
    %v121 = vunpack.c.l.b16 %v50
    %v122 = vunpack.c.l.b16 %v51
    %v123 = vunpack.c.l.b16 %v52
    %v124 = vunpack.c.l.b16 %v53
    %v125 = vunpack.c.l.b16 %v54
    %v126 = vunpack.c.l.b16 %v55
    %v127 = vunpack.c.l.b16 %v56
    %v128 = vunpack.c.l.b16 %v57
    %v129 = vunpack.c.l.b16 %v58
    %v130 = vunpack.c.l.b16 %v59
    %v131 = vunpack.c.l.b16 %v60
    %v132 = vunpack.c.l.b16 %v61
    %v133 = vunpack.c.l.b16 %v62
    %v134 = vunpack.c.l.b16 %v63
    %v135 = vunpack.c.l.b16 %v64
    %v136 = vunpack.c.l.b16 %v65
    %v137 = vunpack.c.l.b16 %v66
    %v138 = vunpack.c.l.b16 %v67
    %v139 = vunpack.c.l.b16 %v68
    %v140 = vunpack.c.l.b16 %v69
    %v141 = vunpack.c.l.b16 %v70
    %v142 = vunpack.c.l.b16 %v71
    %v143 = vunpack.c.l.b16 %v72
    %v144 = vunpack.c.l.b16 %v73
    %v145 = vunpack.c.l.b16 %v74
    %v146 = vunpack.c.l.b16 %v75
    %v147 = vunpack.c.l.b16 %v76
    %v148 = vunpack.c.l.b16 %v77
    %v149 = vunpack.c.l.b16 %v78
    %v150 = vunpack.c.l.b16 %v79
    %v151 = vunpack.c.l.b16 %v80
    %v152 = vpack.c.b16 %v121, %v120
    %v153 = vpack.c.b16 %v123, %v122
    %v154 = vpack.c.b16 %v125, %v124
    %v155 = vpack.c.b16 %v127, %v126
    %v156 = vpack.c.b16 %v129, %v128
    %v157 = vpack.c.b16 %v131, %v130
    %v158 = vpack.c.b16 %v133, %v132
    %v159 = vpack.c.b16 %v135, %v134
    %v160 = vpack.c.b16 %v137, %v136
    %v161 = vpack.c.b16 %v139, %v138
    %v162 = vpack.c.b16 %v141, %v140
    %v163 = vpack.c.b16 %v143, %v142
    %v164 = vpack.c.b16 %v145, %v144
    %v165 = vpack.c.b16 %v147, %v146
    %v166 = vpack.c.b16 %v149, %v148
    %v167 = vpack.c.b16 %v151, %v150
    %184 = vmatprep.subr.bf16.mxu0 0
    %185 = vmatpush1.bf16.msra.mxu0 %v152
    %186 = vmatprep.subr.bf16.mxu0 0
    %187 = vmatpush1.bf16.msra.mxu0 %v153
    %188 = vmatprep.subr.bf16.mxu0 0
    %189 = vmatpush1.bf16.msra.mxu0 %v154
    %190 = vmatprep.subr.bf16.mxu0 0
    %191 = vmatpush1.bf16.msra.mxu0 %v155
    %192 = vmatprep.subr.bf16.mxu0 0
    %193 = vmatpush1.bf16.msra.mxu0 %v156
    %194 = vmatprep.subr.bf16.mxu0 0
    %195 = vmatpush1.bf16.msra.mxu0 %v157
    %196 = vmatprep.subr.bf16.mxu0 0
    %197 = vmatpush1.bf16.msra.mxu0 %v158
    %198 = vmatprep.subr.bf16.mxu0 0
    %199 = vmatpush1.bf16.msra.mxu0 %v159
    %200 = vmatprep.subr.bf16.mxu0 0
    %201 = vmatpush1.bf16.msra.mxu0 %v160
    %202 = vmatprep.subr.bf16.mxu0 0
    %203 = vmatpush1.bf16.msra.mxu0 %v161
    %204 = vmatprep.subr.bf16.mxu0 0
    %205 = vmatpush1.bf16.msra.mxu0 %v162
    %206 = vmatprep.subr.bf16.mxu0 0
    %207 = vmatpush1.bf16.msra.mxu0 %v163
    %208 = vmatprep.subr.bf16.mxu0 0
    %209 = vmatpush1.bf16.msra.mxu0 %v164
    %210 = vmatprep.subr.bf16.mxu0 0
    %211 = vmatpush1.bf16.msra.mxu0 %v165
    %212 = vmatprep.subr.bf16.mxu0 0
    %213 = vmatpush1.bf16.msra.mxu0 %v166
    %214 = vmatprep.subr.bf16.mxu0 0
    %215 = vmatpush1.bf16.msra.mxu0 %v167
    %216 = vmatprep.mubr.bf16.mxu0 %v85
    %217 = vmatmul.mubr.bf16.gmra.mrb[0].mxu0 %v84
    %v218 = vpop.f32.mrb[0].mxu0
    %v219 = vadd.f32 0.0, %v218
    %v220 = vpop.f32.mrb[0].mxu0
    %v221 = vpop.f32.mrb[0].mxu0
    %v222 = vpop.f32.mrb[0].mxu0
    %223 = vdwg.mxu0
    %v224 = vadd.f32 %v47, %v219
    %225 = vst [vmem:[#allocation7] sm:$0xff] %v224
    // Predicated region
    $region26: #{tpu_custom_call.1} parent=1 // pred_check
      %p226 = pneg %p42
    $region27: #{tpu_custom_call.1} parent=1 // pred_check_branch
      %228 = sbr.rel (%p226) target = $region29
    $region28: #{tpu_custom_call.1} parent=1 // pred_region
      %v229 = vld [vmem:[#allocation7] sm:$0xff]
      %v230 = vld [vmem:[%s2] sm:$0x1]
      %v232 = vlaneseq
      %v233 = vshrl.u32 %v232, 7
      %v234 = vsub.s32 0, %v233
      %v235 = vrot.slane %v230, %v234
      %v237 = vadd.f32 %v229, %v235
      %238 = vst [vmem:[#allocation7] sm:$0xff] %v237
    $region29: #{tpu_custom_call.1} parent=1 // pred_fallthru
      _
    // Predicated region
    $region30: #{tpu_custom_call.1} parent=1 // pred_check
      _
    $region31: #{tpu_custom_call.1} parent=1 // pred_check_branch
      %240 = sbr.rel (0) target = $region33
    $region32: #{tpu_custom_call.1} parent=1 // pred_region
      %s242 = ssub.s32 128, 128
      %243 = vsyncadd [#allocation4], %s242
      %s245 = sshll.u32 [#allocation7], 4
      %s246 = int_to_ptr.vmem [resolvable:$true] %s245
      %248 = dma.vmem_to_hbm [thread:$0]  %s246, 128, %s3, [#allocation4]
    $region33: #{tpu_custom_call.1} parent=1 // pred_fallthru
      _
    // Predicated region
    $region34: #{tpu_custom_call.1} parent=1 // pred_check
      _
    $region35: #{tpu_custom_call.1} parent=1 // pred_check_branch
      %250 = sbr.rel (0) target = $region37
    $region36: #{tpu_custom_call.1} parent=1 // pred_region
      %251 = dma.done [#allocation4], 128
    $region37: #{tpu_custom_call.1} parent=1 // pred_fallthru
      _
    %252 = vsyncpa [#allocation3], 1
    %253 = vsyncpa [#allocation6], 1
    %254 = vsyncpa [#allocation4], 1

</llo_original>
